<compile_context>
chip_gen: v5e
topology: v5e:2x2
jax: 0.10.0
libtpu: 0.0.40
codegen_flags: <defaults>
</compile_context>

<pallas_src>
import functools

import jax
import jax.numpy as jnp
from jax.experimental import pallas as pl
from jax.experimental.pallas import tpu as pltpu


def _copy_prefix_kernel(x_ref, o_ref):
    # Input block already covers exactly the kept prefix columns.
    o_ref[...] = x_ref[...]


def _copy_slice_kernel(cols_out, x_ref, o_ref):
    # Input block covers the full flattened row; keep the leading prefix.
    o_ref[...] = x_ref[:, :cols_out]


def remove_latent_tokens(x: jax.Array, grid_size: int) -> jax.Array:
    """Equivalent of x[:, 0:grid_size**2] for x of shape (B, S, D)."""
    B, S, D = x.shape
    g2 = grid_size ** 2
    assert 0 < g2 <= S, "grid_size**2 must not exceed sequence length"

    cols_out = g2 * D          # kept prefix width per flattened row
    cols_in = S * D            # full flattened row width
    itemsize = jnp.dtype(x.dtype).itemsize

    # Lane-aligned fast path: the prefix itself is a legal lane-dense block.
    lane_aligned = (cols_out % 128 == 0)
    in_cols = cols_out if lane_aligned else cols_in

    # Rows per block: target ~2 MiB blocks, respecting the sublane tile for
    # the dtype (8 for 4B, 16 for 2B, 32 for 1B) or using the full batch.
    sublane = max(1, 32 // itemsize)
    target_bytes = 2 * 1024 * 1024
    row_bytes = max(in_cols, cols_out) * itemsize
    bt = max(1, target_bytes // row_bytes)
    if bt >= B:
        bt = B
    else:
        bt = (bt // sublane) * sublane
        if bt == 0:
            bt = B if B < sublane else sublane

    x2 = x.reshape(B, cols_in)
    grid = (pl.cdiv(B, bt),)

    if lane_aligned:
        kernel = _copy_prefix_kernel
        in_spec = pl.BlockSpec((bt, cols_out), lambda b: (b, 0))
    else:
        kernel = functools.partial(_copy_slice_kernel, cols_out)
        in_spec = pl.BlockSpec((bt, cols_in), lambda b: (b, 0))

    # Scoped-VMEM: 2x input + 2x output buffers plus slack; never below the
    # 32 MiB default of v6e/v7x, capped comfortably under v7x's 64 MiB.
    vmem_need = 2 * bt * (in_cols + cols_out) * itemsize + (2 << 20)
    vmem_limit = int(min(max(vmem_need, 32 << 20), 48 << 20))

    out2 = pl.pallas_call(
        kernel,
        out_shape=jax.ShapeDtypeStruct((B, cols_out), x.dtype),
        grid_spec=pltpu.PrefetchScalarGridSpec(
            num_scalar_prefetch=0,
            grid=grid,
            in_specs=[in_spec],
            out_specs=pl.BlockSpec((bt, cols_out), lambda b: (b, 0)),
        ),
        compiler_params=pltpu.CompilerParams(
            dimension_semantics=("parallel",),
            vmem_limit_bytes=vmem_limit,
        ),
    )(x2)

    return out2.reshape(B, g2, D)


if __name__ == "__main__":
    key = jax.random.PRNGKey(0)

    # Case 1: lane-aligned fast path (g2*D = 16*32 = 512, multiple of 128).
    B, S, D = 2, 24, 32
    grid_size = 4
    x = jax.random.normal(key, (B, S, D), dtype=jnp.float32)
    out = jax.block_until_ready(remove_latent_tokens(x, grid_size))
    ref = x[:, 0:grid_size ** 2]
    assert out.shape == (B, grid_size ** 2, D)
    assert out.dtype == x.dtype
    assert bool(jnp.array_equal(out, ref))

    # Case 2: non-lane-aligned prefix (g2*D = 9*32 = 288) exercises the
    # full-row-read fallback path (robustness concern from review).
    B2, S2, D2 = 2, 12, 32
    grid_size2 = 3
    x2 = jax.random.normal(jax.random.PRNGKey(1), (B2, S2, D2), dtype=jnp.float32)
    out2 = jax.block_until_ready(remove_latent_tokens(x2, grid_size2))
    ref2 = x2[:, 0:grid_size2 ** 2]
    assert out2.shape == (B2, grid_size2 ** 2, D2)
    assert bool(jnp.array_equal(out2, ref2))

    print("KERNEL_OK")
</pallas_src>

<mosaic_0001>
module attributes {stable_mosaic.version = 11 : i64} {
  func.func @_copy_prefix_kernel(%arg0: i32, %arg1: memref<2x512xf32, #tpu.memory_space<vmem>>, %arg2: memref<2x512xf32, #tpu.memory_space<vmem>>) attributes {dimension_semantics = [#tpu.dimension_semantics<parallel>], iteration_bounds = array<i64: 1>, scalar_prefetch = 0 : i64, scratch_operands = 0 : i64, tpu.core_type = #tpu.core_type<tc>, window_params = [{transform_indices = @transform_0, window_bounds = array<i64: 2, 512>}, {transform_indices = @transform_1, window_bounds = array<i64: 2, 512>}]} {
    %c0 = arith.constant 0 : index
    %c0_0 = arith.constant 0 : index
    %0 = vector.load %arg1[%c0, %c0_0] : memref<2x512xf32, #tpu.memory_space<vmem>>, vector<2x512xf32>
    %c0_1 = arith.constant 0 : index
    %c0_2 = arith.constant 0 : index
    %1 = vector.load %arg2[%c0_1, %c0_2] : memref<2x512xf32, #tpu.memory_space<vmem>>, vector<2x512xf32>
    tpu.vector_store %arg2[%c0_1, %c0_2], %0 {strides = array<i32>} : memref<2x512xf32, #tpu.memory_space<vmem>>, vector<2x512xf32>,
    return
  }
  func.func @transform_0(%arg0: i32) -> (i32, i32) {
    %c0_i32 = arith.constant 0 : i32
    %c0_i32_0 = arith.constant 0 : i32
    return %arg0, %c0_i32 : i32, i32
  }
  func.func @transform_1(%arg0: i32) -> (i32, i32) {
    %c0_i32 = arith.constant 0 : i32
    %c0_i32_0 = arith.constant 0 : i32
    return %arg0, %c0_i32 : i32, i32
  }
}

</mosaic_0001>

<llo_original>
// kernel: tpu_custom_call.1
$region0: #{tpu_custom_call.1}
  #allocation0 [shape = 'u32[]', space=smem, size = 0x4, offset = 0x4, fixed_abs, tag = 'smem constant byte address 0x4 - core index']
  #allocation1 [shape = 'u32[72,128]{1,0:T(1,128)}', space=vmem, size = 0x9000, scoped, tag = 'internal scratch']
  %s0 = inlined_call_operand.hbm [shape: f32[2,768], index: 0, kind: input, shape index: {}]
  %s1 = inlined_call_operand.hbm [shape: f32[2,512], index: 1, kind: output, shape index: {}]
  %s2 = sld [smem:[#allocation0]]
  $region18: #{tpu_custom_call.1} parent=0
    _
  %s4 = ssub.s32 1, %s2
  %s5 = scalar_select 0, %s4, %s2
  $region1: #{tpu_custom_call.1} parent=0
    #allocation2 [shape = 'u8[4096]{0}', space=vmem, size = 0x1000, scoped, tag = 'input window, operand 0, single buffered']
    #allocation3 [shape = 's32[1]{0}', space=sflag, size = 0x4, scoped, tag = 'scoped memory for tpu_custom_call.1']
    #allocation4 [shape = 's32[1]{0}', space=sflag, size = 0x4, scoped, tag = 'scoped memory for tpu_custom_call.1']
    #allocation5 [shape = 'u8[4096]{0}', space=vmem, size = 0x1000, scoped, tag = 'output window, operand 0, single buffered']
    %6 = vsyncpa [#allocation3], 0
    %7 = vsyncpa [#allocation4], 0
    // Predicated region
    $region2: #{tpu_custom_call.1} parent=1 // pred_check
      _
    $region3: #{tpu_custom_call.1} parent=1 // pred_check_branch
      %9 = sbr.rel (0) target = $region5
    $region4: #{tpu_custom_call.1} parent=1 // pred_region
      %11 = vsyncadd [#allocation3], 0
      %s13 = sshll.u32 %s0, 4
      %s14 = int_to_ptr.hbm [resolvable:$true] %s13
      %s15 = sshll.u32 [#allocation2], 4
      %s16 = int_to_ptr.vmem [resolvable:$true] %s15
      %18 = dma.hbm_to_vmem [thread:$0]  %s14, 128, %s16, [#allocation3]
    $region5: #{tpu_custom_call.1} parent=1 // pred_fallthru
      _
    // Predicated region
    $region6: #{tpu_custom_call.1} parent=1 // pred_check
      _
    $region7: #{tpu_custom_call.1} parent=1 // pred_check_branch
      %20 = sbr.rel (0) target = $region9
    $region8: #{tpu_custom_call.1} parent=1 // pred_region
      %22 = dma.done [#allocation3], 128
    $region9: #{tpu_custom_call.1} parent=1 // pred_fallthru
      _
    %v23 = vld [vmem:[#allocation2] sm:$0xff]
    %24 = vst [vmem:[#allocation5] sm:$0xff] %v23
    // Predicated region
    $region10: #{tpu_custom_call.1} parent=1 // pred_check
      _
    $region11: #{tpu_custom_call.1} parent=1 // pred_check_branch
      %26 = sbr.rel (0) target = $region13
    $region12: #{tpu_custom_call.1} parent=1 // pred_region
      %28 = vsyncadd [#allocation4], 0
      %s30 = sshll.u32 [#allocation5], 4
      %s31 = int_to_ptr.vmem [resolvable:$true] %s30
      %s32 = sshll.u32 %s1, 4
      %s33 = int_to_ptr.hbm [resolvable:$true] %s32
      %35 = dma.vmem_to_hbm [thread:$0]  %s31, 128, %s33, [#allocation4]
    $region13: #{tpu_custom_call.1} parent=1 // pred_fallthru
      _
    // Predicated region
    $region14: #{tpu_custom_call.1} parent=1 // pred_check
      _
    $region15: #{tpu_custom_call.1} parent=1 // pred_check_branch
      %37 = sbr.rel (0) target = $region17
    $region16: #{tpu_custom_call.1} parent=1 // pred_region
      %39 = dma.done [#allocation4], 128
    $region17: #{tpu_custom_call.1} parent=1 // pred_fallthru
      _
    %40 = vsyncpa [#allocation3], 1
    %41 = vsyncpa [#allocation4], 1

</llo_original>
